<compile_context>
chip_gen: v7x
topology: tpu7x:2x2x1
jax: 0.10.0
libtpu: 0.0.40
codegen_flags: <defaults>
</compile_context>

<pallas_src>
from functools import partial

import jax
import jax.numpy as jnp
from jax.experimental import pallas as pl
from jax.experimental.pallas import tpu as pltpu


# ----------------------------------------------------------------------------
# Fused Pallas kernel: Linear -> ReLU -> Linear -> ReLU (one row tile per step)
# ----------------------------------------------------------------------------
def _adapter_kernel(x_ref, w1_ref, w2_ref, o_ref):
    x = x_ref[...]                                                     # (TM, C)
    h = jnp.dot(x, w1_ref[...], preferred_element_type=jnp.float32)   # MXU
    h = jnp.maximum(h, 0.0)                                            # ReLU
    y = jnp.dot(h, w2_ref[...], preferred_element_type=jnp.float32)   # MXU
    o_ref[...] = jnp.maximum(y, 0.0).astype(o_ref.dtype)               # ReLU


def _adapter_call(x2d, w1_t, w2_t, tm):
    """x2d: (Mp, C) with Mp a multiple of tm; weights in (in, out) layout."""
    Mp, C = x2d.shape
    H = w1_t.shape[1]
    grid = (Mp // tm,)
    cost = pl.CostEstimate(
        flops=4 * Mp * C * H,            # two matmuls: 2*M*C*H each
        transcendentals=0,
        bytes_accessed=4 * (2 * Mp * C + 2 * C * H),  # x + out + both weights
    )
    return pl.pallas_call(
        _adapter_kernel,
        out_shape=jax.ShapeDtypeStruct((Mp, C), jnp.float32),
        grid=grid,
        in_specs=[
            pl.BlockSpec((tm, C), lambda i: (i, 0)),   # row tile of x
            pl.BlockSpec((C, H), lambda i: (0, 0)),    # W1^T, VMEM-resident
            pl.BlockSpec((H, C), lambda i: (0, 0)),    # W2^T, VMEM-resident
        ],
        out_specs=pl.BlockSpec((tm, C), lambda i: (i, 0)),
        compiler_params=pltpu.CompilerParams(
            dimension_semantics=("parallel",),          # megacore on v7x
        ),
        cost_estimate=cost,
    )(x2d, w1_t, w2_t)


@partial(jax.jit, static_argnames=("tm",))
def adapter_forward(x, w1_t, w2_t, tm=1024):
    """x: (..., c_in); w1_t: (c_in, c_in//r); w2_t: (c_in//r, c_in)."""
    lead, C = x.shape[:-1], x.shape[-1]
    xf = x.reshape(-1, C).astype(jnp.float32)
    M = xf.shape[0]
    # Tile size: large (>=512 preferred) but never bigger than needed; always a
    # power of two >= 8 so the (TM, C) block satisfies the sublane constraint.
    tm_eff = min(tm, pl.next_power_of_2(max(M, 8)))
    Mp = pl.cdiv(M, tm_eff) * tm_eff
    if Mp != M:
        xf = jnp.pad(xf, ((0, Mp - M), (0, 0)))        # zero rows -> zero out
    y = _adapter_call(xf, w1_t, w2_t, tm_eff)
    return y[:M].reshape(*lead, C)


# ----------------------------------------------------------------------------
# Deterministic synthetic run
# ----------------------------------------------------------------------------
if __name__ == "__main__":
    B, S = 2, 8              # batch, tokens  -> M = 16 rows
    C_IN = 64                # feature dim
    REDUCTION = 4
    HID = C_IN // REDUCTION  # 16

    key = jax.random.PRNGKey(0)
    kx, k1, k2 = jax.random.split(key, 3)
    x = jax.random.normal(kx, (B, S, C_IN), dtype=jnp.float32)
    # Weights stored as (in, out) == W^T of the PyTorch (out, in) layout.
    w1_t = (0.05 * jax.random.normal(k1, (C_IN, HID))).astype(jnp.float32)
    w2_t = (0.05 * jax.random.normal(k2, (HID, C_IN))).astype(jnp.float32)

    out = adapter_forward(x, w1_t, w2_t)
    out = jax.block_until_ready(out)

    # Pure-JAX reference (same math as the PyTorch module)
    ref = jnp.maximum(
        jnp.maximum(x.reshape(-1, C_IN) @ w1_t, 0.0) @ w2_t, 0.0
    ).reshape(B, S, C_IN)

    assert out.shape == (B, S, C_IN) and out.dtype == jnp.float32
    assert bool(jnp.all(jnp.isfinite(out)))
    assert bool(jnp.allclose(out, ref, atol=1e-5, rtol=1e-5))
    print("KERNEL_OK")
</pallas_src>

<mosaic_0001>
module attributes {stable_mosaic.version = 11 : i64} {
  func.func @_adapter_kernel(%arg0: i32, %arg1: memref<16x64xf32, #tpu.memory_space<vmem>>, %arg2: memref<64x16xf32, #tpu.memory_space<vmem>>, %arg3: memref<16x64xf32, #tpu.memory_space<vmem>>, %arg4: memref<16x64xf32, #tpu.memory_space<vmem>>) attributes {dimension_semantics = [#tpu.dimension_semantics<parallel>], iteration_bounds = array<i64: 1>, scalar_prefetch = 0 : i64, scratch_operands = 0 : i64, tpu.core_type = #tpu.core_type<tc>, window_params = [{transform_indices = @transform_0, window_bounds = array<i64: 16, 64>}, {pipeline_mode = #tpu.pipeline_mode<synchronous>, transform_indices = @transform_1, window_bounds = array<i64: 64, 16>}, {pipeline_mode = #tpu.pipeline_mode<synchronous>, transform_indices = @transform_2, window_bounds = array<i64: 16, 64>}, {transform_indices = @transform_3, window_bounds = array<i64: 16, 64>}]} {
    %c0 = arith.constant 0 : index
    %c0_0 = arith.constant 0 : index
    %0 = vector.load %arg1[%c0, %c0_0] : memref<16x64xf32, #tpu.memory_space<vmem>>, vector<16x64xf32>
    %c0_1 = arith.constant 0 : index
    %c0_2 = arith.constant 0 : index
    %1 = vector.load %arg2[%c0_1, %c0_2] : memref<64x16xf32, #tpu.memory_space<vmem>>, vector<64x16xf32>
    %cst = arith.constant dense<0.000000e+00> : vector<16x16xf32>
    %2 = tpu.matmul %0, %1, %cst {dimension_numbers = #tpu.dot_dimension_numbers<[1], [0], [0], [1], [0, 0, 1, 1], [], []>} : vector<16x64xf32>, vector<64x16xf32>, vector<16x16xf32> -> vector<16x16xf32>
    %cst_3 = arith.constant 0.000000e+00 : f32
    %3 = vector.broadcast %cst_3 : f32 to vector<16x16xf32>
    %4 = arith.maximumf %2, %3 : vector<16x16xf32>
    %c0_4 = arith.constant 0 : index
    %c0_5 = arith.constant 0 : index
    %5 = vector.load %arg3[%c0_4, %c0_5] : memref<16x64xf32, #tpu.memory_space<vmem>>, vector<16x64xf32>
    %cst_6 = arith.constant dense<0.000000e+00> : vector<16x64xf32>
    %6 = tpu.matmul %4, %5, %cst_6 {dimension_numbers = #tpu.dot_dimension_numbers<[1], [0], [0], [1], [0, 0, 1, 1], [], []>} : vector<16x16xf32>, vector<16x64xf32>, vector<16x64xf32> -> vector<16x64xf32>
    %cst_7 = arith.constant 0.000000e+00 : f32
    %7 = vector.broadcast %cst_7 : f32 to vector<16x64xf32>
    %8 = arith.maximumf %6, %7 : vector<16x64xf32>
    %c0_8 = arith.constant 0 : index
    %c0_9 = arith.constant 0 : index
    %9 = vector.load %arg4[%c0_8, %c0_9] : memref<16x64xf32, #tpu.memory_space<vmem>>, vector<16x64xf32>
    tpu.vector_store %arg4[%c0_8, %c0_9], %8 {strides = array<i32>} : memref<16x64xf32, #tpu.memory_space<vmem>>, vector<16x64xf32>,
    return
  }
  func.func @transform_0(%arg0: i32) -> (i32, i32) {
    %c0_i32 = arith.constant 0 : i32
    %c0_i32_0 = arith.constant 0 : i32
    return %arg0, %c0_i32 : i32, i32
  }
  func.func @transform_1(%arg0: i32) -> (i32, i32) {
    %c0_i32 = arith.constant 0 : i32
    %c0_i32_0 = arith.constant 0 : i32
    %c0_i32_1 = arith.constant 0 : i32
    return %c0_i32, %c0_i32_0 : i32, i32
  }
  func.func @transform_2(%arg0: i32) -> (i32, i32) {
    %c0_i32 = arith.constant 0 : i32
    %c0_i32_0 = arith.constant 0 : i32
    %c0_i32_1 = arith.constant 0 : i32
    return %c0_i32, %c0_i32_0 : i32, i32
  }
  func.func @transform_3(%arg0: i32) -> (i32, i32) {
    %c0_i32 = arith.constant 0 : i32
    %c0_i32_0 = arith.constant 0 : i32
    return %arg0, %c0_i32 : i32, i32
  }
}

</mosaic_0001>

<llo_original>
// kernel: adapter_forward.1
$region0: #{adapter_forward.1}
  #allocation0 [shape = 'u32[]', space=smem, size = 0x4, offset = 0x4, fixed_abs, tag = 'smem constant byte address 0x4 - core index']
  #allocation1 [shape = 'u32[144,128]{1,0:T(1,128)}', space=vmem, size = 0x12000, scoped, tag = 'internal scratch']
  %s0 = inlined_call_operand.vmem [shape: f32[16,64], index: 0, kind: input, shape index: {}]
  %s1 = inlined_call_operand.vmem [shape: f32[64,16], index: 1, kind: input, shape index: {}]
  %s2 = inlined_call_operand.vmem [shape: f32[16,64], index: 2, kind: input, shape index: {}]
  %s3 = inlined_call_operand.hbm [shape: f32[16,64], index: 3, kind: output, shape index: {}]
  %s4 = sld [smem:[#allocation0]]
  $region22: #{adapter_forward.1} parent=0
    _
  %s6 = ssub.s32 1, %s4
  %s7 = scalar_select 0, %s6, %s4
  $region1: #{adapter_forward.1} parent=0
    #allocation2 [shape = 'u8[8192]{0}', space=vmem, size = 0x2000, scoped, tag = 'output window, operand 0, single buffered']
    #allocation3 [shape = 's32[1]{0}', space=sflag, size = 0x4, scoped, tag = 'scoped memory for adapter_forward.1']
    %8 = vsyncpa [#allocation3], 0
    // Predicated region
    $region2: #{adapter_forward.1} parent=1 // pred_check
      _
    $region3: #{adapter_forward.1} parent=1 // pred_check_branch
      %10 = sbr.rel (0) target = $region5
    $region4: #{adapter_forward.1} parent=1 // pred_region
      _
    $region5: #{adapter_forward.1} parent=1 // pred_fallthru
      _
    // Predicated region
    $region6: #{adapter_forward.1} parent=1 // pred_check
      _
    $region7: #{adapter_forward.1} parent=1 // pred_check_branch
      %12 = sbr.rel (0) target = $region9
    $region8: #{adapter_forward.1} parent=1 // pred_region
      _
    $region9: #{adapter_forward.1} parent=1 // pred_fallthru
      _
    // Predicated region
    $region10: #{adapter_forward.1} parent=1 // pred_check
      _
    $region11: #{adapter_forward.1} parent=1 // pred_check_branch
      %14 = sbr.rel (0) target = $region13
    $region12: #{adapter_forward.1} parent=1 // pred_region
      _
    $region13: #{adapter_forward.1} parent=1 // pred_fallthru
      _
    %v15 = vld [vmem:[%s0] sm:$0xff]
    %v16 = vld [vmem:[%s0 + $0x8] sm:$0xff]
    %v17 = vld [vmem:[%s1] sm:$0xff]
    %v18 = vld [vmem:[%s1 + $0x8] sm:$0xff]
    %v19 = vld [vmem:[%s1 + $0x10] sm:$0xff]
    %v20 = vld [vmem:[%s1 + $0x18] sm:$0xff]
    %v21 = vld [vmem:[%s1 + $0x20] sm:$0xff]
    %v22 = vld [vmem:[%s1 + $0x28] sm:$0xff]
    %v23 = vld [vmem:[%s1 + $0x30] sm:$0xff]
    %v24 = vld [vmem:[%s1 + $0x38] sm:$0xff]
    %vm25 = vcmask 523264
    %v27 = vsel %vm25, %v15, 0
    %v30 = vsel %vm25, %v16, 0
    %32 = vmatprep.subr.mxu0 0.0
    %33 = vmatpush1.msra.mxu0 %v17
    %34 = vmatprep.subr.mxu0 0.0
    %35 = vmatpush1.msra.mxu0 %v18
    %36 = vmatprep.subr.mxu0 0.0
    %37 = vmatpush1.msra.mxu0 %v19
    %38 = vmatprep.subr.mxu0 0.0
    %39 = vmatpush1.msra.mxu0 %v20
    %40 = vmatprep.subr.mxu0 0.0
    %41 = vmatpush1.msra.mxu0 %v21
    %42 = vmatprep.subr.mxu0 0.0
    %43 = vmatpush1.msra.mxu0 %v22
    %44 = vmatprep.subr.mxu0 0.0
    %45 = vmatpush1.msra.mxu0 %v23
    %46 = vmatprep.subr.mxu0 0.0
    %47 = vmatpush1.msra.mxu0 %v24
    %48 = vmatprep.subr.mxu0 0.0
    %49 = vmatpush1.msra.mxu0 0.0
    %50 = vmatprep.subr.mxu0 0.0
    %51 = vmatpush1.msra.mxu0 0.0
    %52 = vmatprep.subr.mxu0 0.0
    %53 = vmatpush1.msra.mxu0 0.0
    %54 = vmatprep.subr.mxu0 0.0
    %55 = vmatpush1.msra.mxu0 0.0
    %56 = vmatprep.subr.mxu0 0.0
    %57 = vmatpush1.msra.mxu0 0.0
    %58 = vmatprep.subr.mxu0 0.0
    %59 = vmatpush1.msra.mxu0 0.0
    %60 = vmatprep.subr.mxu0 0.0
    %61 = vmatpush1.msra.mxu0 0.0
    %62 = vmatprep.subr.mxu0 0.0
    %63 = vmatpush1.msra.mxu0 0.0
    %64 = vmatprep.subr.mxu0 0.0
    %65 = vmatpush1.msra.mxu0 0.0
    %66 = vmatprep.subr.mxu0 0.0
    %67 = vmatpush1.msra.mxu0 0.0
    %68 = vmatprep.subr.mxu0 0.0
    %69 = vmatpush1.msra.mxu0 0.0
    %70 = vmatprep.subr.mxu0 0.0
    %71 = vmatpush1.msra.mxu0 0.0
    %72 = vmatprep.subr.mxu0 0.0
    %73 = vmatpush1.msra.mxu0 0.0
    %74 = vmatprep.subr.mxu0 0.0
    %75 = vmatpush1.msra.mxu0 0.0
    %76 = vmatprep.subr.mxu0 0.0
    %77 = vmatpush1.msra.mxu0 0.0
    %78 = vmatprep.subr.mxu0 0.0
    %79 = vmatpush1.msra.mxu0 0.0
    %80 = vmatprep.subr.mxu0 0.0
    %81 = vmatpush1.msra.mxu0 0.0
    %82 = vmatprep.subr.mxu0 0.0
    %83 = vmatpush1.msra.mxu0 0.0
    %84 = vmatprep.subr.mxu0 0.0
    %85 = vmatpush1.msra.mxu0 0.0
    %86 = vmatprep.subr.mxu0 0.0
    %87 = vmatpush1.msra.mxu0 0.0
    %88 = vmatprep.subr.mxu0 0.0
    %89 = vmatpush1.msra.mxu0 0.0
    %90 = vmatprep.subr.mxu0 0.0
    %91 = vmatpush1.msra.mxu0 0.0
    %92 = vmatprep.subr.mxu0 0.0
    %93 = vmatpush1.msra.mxu0 0.0
    %94 = vmatprep.subr.mxu0 0.0
    %95 = vmatpush1.msra.mxu0 0.0
    %96 = vmatprep.mubr.f32.mxu0 0.0
    %97 = vmatmul.mubr.f32.gmra.mrb[0].mxu0 %v27
    %v98 = vpop.f32.mrb[0].mxu0
    %v99 = vadd.f32 0.0, %v98
    %v100 = vpop.f32.mrb[0].mxu0
    %101 = vmatprep.mubr.f32.mxu0 0.0
    %102 = vmatmul.mubr.f32.gmra.mrb[0].mxu0 %v30
    %v103 = vpop.f32.mrb[0].mxu0
    %v104 = vadd.f32 0.0, %v103
    %v105 = vpop.f32.mrb[0].mxu0
    %106 = vdwg.mxu0
    %v107 = vmax.f32 %v99, 0.0
    %v108 = vmax.f32 %v104, 0.0
    %v109 = vld [vmem:[%s2] sm:$0xff]
    %v110 = vld [vmem:[%s2 + $0x8] sm:$0xff]
    %vm111 = vcmask 130048
    %v113 = vsel %vm111, %v107, 0
    %v116 = vsel %vm111, %v108, 0
    %118 = vmatprep.subr.mxu0 0.0
    %119 = vmatpush1.msra.mxu0 %v109
    %120 = vmatprep.subr.mxu0 0.0
    %121 = vmatpush1.msra.mxu0 %v110
    %122 = vmatprep.subr.mxu0 0.0
    %123 = vmatpush1.msra.mxu0 0.0
    %124 = vmatprep.subr.mxu0 0.0
    %125 = vmatpush1.msra.mxu0 0.0
    %126 = vmatprep.subr.mxu0 0.0
    %127 = vmatpush1.msra.mxu0 0.0
    %128 = vmatprep.subr.mxu0 0.0
    %129 = vmatpush1.msra.mxu0 0.0
    %130 = vmatprep.subr.mxu0 0.0
    %131 = vmatpush1.msra.mxu0 0.0
    %132 = vmatprep.subr.mxu0 0.0
    %133 = vmatpush1.msra.mxu0 0.0
    %134 = vmatprep.subr.mxu0 0.0
    %135 = vmatpush1.msra.mxu0 0.0
    %136 = vmatprep.subr.mxu0 0.0
    %137 = vmatpush1.msra.mxu0 0.0
    %138 = vmatprep.subr.mxu0 0.0
    %139 = vmatpush1.msra.mxu0 0.0
    %140 = vmatprep.subr.mxu0 0.0
    %141 = vmatpush1.msra.mxu0 0.0
    %142 = vmatprep.subr.mxu0 0.0
    %143 = vmatpush1.msra.mxu0 0.0
    %144 = vmatprep.subr.mxu0 0.0
    %145 = vmatpush1.msra.mxu0 0.0
    %146 = vmatprep.subr.mxu0 0.0
    %147 = vmatpush1.msra.mxu0 0.0
    %148 = vmatprep.subr.mxu0 0.0
    %149 = vmatpush1.msra.mxu0 0.0
    %150 = vmatprep.subr.mxu0 0.0
    %151 = vmatpush1.msra.mxu0 0.0
    %152 = vmatprep.subr.mxu0 0.0
    %153 = vmatpush1.msra.mxu0 0.0
    %154 = vmatprep.subr.mxu0 0.0
    %155 = vmatpush1.msra.mxu0 0.0
    %156 = vmatprep.subr.mxu0 0.0
    %157 = vmatpush1.msra.mxu0 0.0
    %158 = vmatprep.subr.mxu0 0.0
    %159 = vmatpush1.msra.mxu0 0.0
    %160 = vmatprep.subr.mxu0 0.0
    %161 = vmatpush1.msra.mxu0 0.0
    %162 = vmatprep.subr.mxu0 0.0
    %163 = vmatpush1.msra.mxu0 0.0
    %164 = vmatprep.subr.mxu0 0.0
    %165 = vmatpush1.msra.mxu0 0.0
    %166 = vmatprep.subr.mxu0 0.0
    %167 = vmatpush1.msra.mxu0 0.0
    %168 = vmatprep.subr.mxu0 0.0
    %169 = vmatpush1.msra.mxu0 0.0
    %170 = vmatprep.subr.mxu0 0.0
    %171 = vmatpush1.msra.mxu0 0.0
    %172 = vmatprep.subr.mxu0 0.0
    %173 = vmatpush1.msra.mxu0 0.0
    %174 = vmatprep.subr.mxu0 0.0
    %175 = vmatpush1.msra.mxu0 0.0
    %176 = vmatprep.subr.mxu0 0.0
    %177 = vmatpush1.msra.mxu0 0.0
    %178 = vmatprep.subr.mxu0 0.0
    %179 = vmatpush1.msra.mxu0 0.0
    %180 = vmatprep.subr.mxu0 0.0
    %181 = vmatpush1.msra.mxu0 0.0
    %182 = vmatprep.mubr.f32.mxu0 0.0
    %183 = vmatmul.mubr.f32.gmra.mrb[0].mxu0 %v113
    %v184 = vpop.f32.mrb[0].mxu0
    %v185 = vadd.f32 0.0, %v184
    %v186 = vpop.f32.mrb[0].mxu0
    %187 = vmatprep.mubr.f32.mxu0 0.0
    %188 = vmatmul.mubr.f32.gmra.mrb[0].mxu0 %v116
    %v189 = vpop.f32.mrb[0].mxu0
    %v190 = vadd.f32 0.0, %v189
    %v191 = vpop.f32.mrb[0].mxu0
    %192 = vdwg.mxu0
    %v193 = vmax.f32 %v185, 0.0
    %v194 = vmax.f32 %v190, 0.0
    %195 = vst.msk [vmem:[#allocation2] sm:$0xff] %vm25, %v193
    %196 = vst.msk [vmem:[#allocation2 + $0x8] sm:$0xff] %vm25, %v194
    // Predicated region
    $region14: #{adapter_forward.1} parent=1 // pred_check
      _
    $region15: #{adapter_forward.1} parent=1 // pred_check_branch
      %198 = sbr.rel (0) target = $region17
    $region16: #{adapter_forward.1} parent=1 // pred_region
      %s200 = ssub.s32 256, 256
      %201 = vsyncadd [#allocation3], %s200
      %s202 = sshll.u32 [#allocation2], 4
      %s203 = int_to_ptr.vmem [resolvable:$true] %s202
      %208 = dma.vmem_to_hbm [thread:$0]  %s203, 256, %s3, [#allocation3], 128, 128, 8
    $region17: #{adapter_forward.1} parent=1 // pred_fallthru
      _
    // Predicated region
    $region18: #{adapter_forward.1} parent=1 // pred_check
      _
    $region19: #{adapter_forward.1} parent=1 // pred_check_branch
      %210 = sbr.rel (0) target = $region21
    $region20: #{adapter_forward.1} parent=1 // pred_region
      %211 = dma.done [#allocation3], 256
    $region21: #{adapter_forward.1} parent=1 // pred_fallthru
      _
    %212 = vsyncpa [#allocation3], 1

</llo_original>
